<compile_context>
chip_gen: v7x
topology: tpu7x:2x2x1
jax: 0.10.0
libtpu: 0.0.40
codegen_flags: <defaults>
</compile_context>

<pallas_src>
import jax
import jax.numpy as jnp
from jax import lax
from jax.experimental import pallas as pl
from jax.experimental.pallas import tpu as pltpu


_SQRT_HALF = 0.7071067811865476  # 1/sqrt(2)


def _gelu_exact(v):
    # PyTorch nn.GELU() default: exact erf-based GELU.
    return 0.5 * v * (1.0 + lax.erf(v * _SQRT_HALF))


def _round_up(n, m):
    return ((n + m - 1) // m) * m


def mlp_block_kernel(x_ref, w1_ref, b1_ref, w2_ref, b2_ref, out_ref):
    x = x_ref[...]                    # (TM, H)
    b1 = b1_ref[...]                  # (1, Dm)
    b2 = b2_ref[...]                  # (1, H)

    # fc1 + exact GELU, accumulated in f32 on the MXU.
    h = jnp.dot(x, w1_ref[...], preferred_element_type=jnp.float32) + b1
    h = _gelu_exact(h)                # (TM, Dm), f32

    # fc2; cast the activation back to the weight dtype for the second matmul
    # (no-op for f32 inputs, halves MXU input width for bf16 models).
    y = jnp.dot(h.astype(w2_ref.dtype), w2_ref[...],
                preferred_element_type=jnp.float32) + b2

    out_ref[...] = y.astype(out_ref.dtype)   # explicit cast for bf16 outputs


def _build_mlp_call(Mp, H, Dm, TM, dtype, single_buffer_weights):
    """Builds the pallas_call for a padded (Mp, H) input, TM rows per step."""
    weight_kwargs = (
        dict(pipeline_mode=pl.Buffered(1)) if single_buffer_weights else {}
    )
    # Grid-invariant operands (weights / biases): constant block index.
    const2d = lambda shape: pl.BlockSpec(shape, lambda i: (0, 0),
                                         **weight_kwargs)

    itemsize = jnp.dtype(dtype).itemsize
    cost = pl.CostEstimate(
        flops=4 * Mp * H * Dm,                       # two (Mp,H,Dm) matmuls
        transcendentals=Mp * Dm,                     # one erf per hidden act
        bytes_accessed=itemsize * (2 * Mp * H + 2 * H * Dm + Dm + H),
    )

    return pl.pallas_call(
        mlp_block_kernel,
        out_shape=jax.ShapeDtypeStruct((Mp, H), dtype),
        grid_spec=pltpu.PrefetchScalarGridSpec(
            num_scalar_prefetch=0,
            grid=(Mp // TM,),
            in_specs=[
                pl.BlockSpec((TM, H), lambda i: (i, 0)),   # x rows
                const2d((H, Dm)),                          # fc1 weight (W1^T)
                const2d((1, Dm)),                          # fc1 bias
                const2d((Dm, H)),                          # fc2 weight (W2^T)
                const2d((1, H)),                           # fc2 bias
            ],
            out_specs=pl.BlockSpec((TM, H), lambda i: (i, 0)),
        ),
        compiler_params=pltpu.CompilerParams(
            dimension_semantics=("parallel",)),
        cost_estimate=cost,
    )


def mlp_block(x, w1, b1, w2, b2, *, block_rows=256):
    """fc2(gelu(fc1(x))) over the last dim of x (any leading shape).

    w1: (H, Dm) = fc1.weight.T, b1: (1, Dm)
    w2: (Dm, H) = fc2.weight.T, b2: (1, H)
    """
    orig_shape = x.shape
    H = orig_shape[-1]
    Dm = w1.shape[-1]

    # Fold all leading dims into the matmul M dimension.
    x2 = x.reshape(-1, H)
    M = x2.shape[0]
    TM = min(block_rows, _round_up(M, 8))   # 256-row tiles (or one full block)
    Mp = _round_up(M, TM)
    if Mp != M:
        x2 = jnp.pad(x2, ((0, Mp - M), (0, 0)))

    try:
        fn = _build_mlp_call(Mp, H, Dm, TM, x.dtype,
                             single_buffer_weights=True)
        out2 = jax.block_until_ready(fn(x2, w1, b1, w2, b2))
    except Exception:
        # pl.Buffered(1) is a pure VMEM optimization for the grid-invariant
        # weights; fall back to default double-buffering if unsupported.
        fn = _build_mlp_call(Mp, H, Dm, TM, x.dtype,
                             single_buffer_weights=False)
        out2 = fn(x2, w1, b1, w2, b2)

    if Mp != M:
        out2 = out2[:M]
    return out2.reshape(orig_shape)


def reference_mlp_block(x, w1, b1, w2, b2):
    h = _gelu_exact(x @ w1 + b1)
    return h @ w2 + b2


if __name__ == "__main__":
    # MlpBlock(hidden_dim=32, mlp_dim=64) applied to a (batch, seq, hidden)
    # activation, as in MLP-Mixer.
    B, S, H, Dm = 2, 8, 32, 64

    key = jax.random.PRNGKey(0)
    keys = jax.random.split(key, 5)

    x = jax.random.normal(keys[0], (B, S, H), dtype=jnp.float32)

    scale = 0.1
    # Weights stored already transposed relative to nn.Linear.weight:
    # y @ W^T + b  <=>  y @ (stored W) + b.
    w1 = scale * jax.random.normal(keys[1], (H, Dm), dtype=jnp.float32)
    b1 = scale * jax.random.normal(keys[2], (1, Dm), dtype=jnp.float32)
    w2 = scale * jax.random.normal(keys[3], (Dm, H), dtype=jnp.float32)
    b2 = scale * jax.random.normal(keys[4], (1, H), dtype=jnp.float32)

    out = mlp_block(x, w1, b1, w2, b2)
    out = jax.block_until_ready(out)

    ref = reference_mlp_block(x, w1, b1, w2, b2)
    assert out.shape == (B, S, H)
    assert jnp.allclose(out, ref, atol=1e-4, rtol=1e-4), "mismatch vs reference"

    print("KERNEL_OK")
</pallas_src>

<mosaic_0001>
module attributes {stable_mosaic.version = 11 : i64} {
  func.func @mlp_block_kernel(%arg0: i32, %arg1: memref<16x32xf32, #tpu.memory_space<vmem>>, %arg2: memref<32x64xf32, #tpu.memory_space<vmem>>, %arg3: memref<1x64xf32, #tpu.memory_space<vmem>>, %arg4: memref<64x32xf32, #tpu.memory_space<vmem>>, %arg5: memref<1x32xf32, #tpu.memory_space<vmem>>, %arg6: memref<16x32xf32, #tpu.memory_space<vmem>>) attributes {dimension_semantics = [#tpu.dimension_semantics<parallel>], iteration_bounds = array<i64: 1>, scalar_prefetch = 0 : i64, scratch_operands = 0 : i64, tpu.core_type = #tpu.core_type<tc>, window_params = [{transform_indices = @transform_0, window_bounds = array<i64: 16, 32>}, {pipeline_mode = #tpu.pipeline_mode<synchronous>, transform_indices = @transform_1, window_bounds = array<i64: 32, 64>}, {pipeline_mode = #tpu.pipeline_mode<synchronous>, transform_indices = @transform_2, window_bounds = array<i64: 1, 64>}, {pipeline_mode = #tpu.pipeline_mode<synchronous>, transform_indices = @transform_3, window_bounds = array<i64: 64, 32>}, {pipeline_mode = #tpu.pipeline_mode<synchronous>, transform_indices = @transform_4, window_bounds = array<i64: 1, 32>}, {transform_indices = @transform_5, window_bounds = array<i64: 16, 32>}]} {
    %c0 = arith.constant 0 : index
    %c0_0 = arith.constant 0 : index
    %0 = vector.load %arg1[%c0, %c0_0] : memref<16x32xf32, #tpu.memory_space<vmem>>, vector<16x32xf32>
    %c0_1 = arith.constant 0 : index
    %c0_2 = arith.constant 0 : index
    %1 = vector.load %arg3[%c0_1, %c0_2] : memref<1x64xf32, #tpu.memory_space<vmem>>, vector<1x64xf32>
    %c0_3 = arith.constant 0 : index
    %c0_4 = arith.constant 0 : index
    %2 = vector.load %arg5[%c0_3, %c0_4] : memref<1x32xf32, #tpu.memory_space<vmem>>, vector<1x32xf32>
    %c0_5 = arith.constant 0 : index
    %c0_6 = arith.constant 0 : index
    %3 = vector.load %arg2[%c0_5, %c0_6] : memref<32x64xf32, #tpu.memory_space<vmem>>, vector<32x64xf32>
    %cst = arith.constant dense<0.000000e+00> : vector<16x64xf32>
    %4 = tpu.matmul %0, %3, %cst {dimension_numbers = #tpu.dot_dimension_numbers<[1], [0], [0], [1], [0, 0, 1, 1], [], []>} : vector<16x32xf32>, vector<32x64xf32>, vector<16x64xf32> -> vector<16x64xf32>
    %5 = vector.broadcast %1 : vector<1x64xf32> to vector<16x64xf32>
    %6 = arith.addf %4, %5 : vector<16x64xf32>
    %cst_7 = arith.constant 5.000000e-01 : f32
    %7 = vector.broadcast %cst_7 : f32 to vector<16x64xf32>
    %8 = arith.mulf %7, %6 : vector<16x64xf32>
    %cst_8 = arith.constant 0.707106769 : f32
    %9 = vector.broadcast %cst_8 : f32 to vector<16x64xf32>
    %10 = arith.mulf %6, %9 : vector<16x64xf32>
    %11 = math.erf %10 : vector<16x64xf32>
    %cst_9 = arith.constant 1.000000e+00 : f32
    %12 = vector.broadcast %cst_9 : f32 to vector<16x64xf32>
    %13 = arith.addf %12, %11 : vector<16x64xf32>
    %14 = arith.mulf %8, %13 : vector<16x64xf32>
    %c0_10 = arith.constant 0 : index
    %c0_11 = arith.constant 0 : index
    %15 = vector.load %arg4[%c0_10, %c0_11] : memref<64x32xf32, #tpu.memory_space<vmem>>, vector<64x32xf32>
    %cst_12 = arith.constant dense<0.000000e+00> : vector<16x32xf32>
    %16 = tpu.matmul %14, %15, %cst_12 {dimension_numbers = #tpu.dot_dimension_numbers<[1], [0], [0], [1], [0, 0, 1, 1], [], []>} : vector<16x64xf32>, vector<64x32xf32>, vector<16x32xf32> -> vector<16x32xf32>
    %17 = vector.broadcast %2 : vector<1x32xf32> to vector<16x32xf32>
    %18 = arith.addf %16, %17 : vector<16x32xf32>
    %c0_13 = arith.constant 0 : index
    %c0_14 = arith.constant 0 : index
    %19 = vector.load %arg6[%c0_13, %c0_14] : memref<16x32xf32, #tpu.memory_space<vmem>>, vector<16x32xf32>
    tpu.vector_store %arg6[%c0_13, %c0_14], %18 {strides = array<i32>} : memref<16x32xf32, #tpu.memory_space<vmem>>, vector<16x32xf32>,
    return
  }
  func.func @transform_0(%arg0: i32) -> (i32, i32) {
    %c0_i32 = arith.constant 0 : i32
    %c0_i32_0 = arith.constant 0 : i32
    return %arg0, %c0_i32 : i32, i32
  }
  func.func @transform_1(%arg0: i32) -> (i32, i32) {
    %c0_i32 = arith.constant 0 : i32
    %c0_i32_0 = arith.constant 0 : i32
    %c0_i32_1 = arith.constant 0 : i32
    return %c0_i32, %c0_i32_0 : i32, i32
  }
  func.func @transform_2(%arg0: i32) -> (i32, i32) {
    %c0_i32 = arith.constant 0 : i32
    %c0_i32_0 = arith.constant 0 : i32
    %c0_i32_1 = arith.constant 0 : i32
    return %c0_i32, %c0_i32_0 : i32, i32
  }
  func.func @transform_3(%arg0: i32) -> (i32, i32) {
    %c0_i32 = arith.constant 0 : i32
    %c0_i32_0 = arith.constant 0 : i32
    %c0_i32_1 = arith.constant 0 : i32
    return %c0_i32, %c0_i32_0 : i32, i32
  }
  func.func @transform_4(%arg0: i32) -> (i32, i32) {
    %c0_i32 = arith.constant 0 : i32
    %c0_i32_0 = arith.constant 0 : i32
    %c0_i32_1 = arith.constant 0 : i32
    return %c0_i32, %c0_i32_0 : i32, i32
  }
  func.func @transform_5(%arg0: i32) -> (i32, i32) {
    %c0_i32 = arith.constant 0 : i32
    %c0_i32_0 = arith.constant 0 : i32
    return %arg0, %c0_i32 : i32, i32
  }
}

module attributes {stable_mosaic.version = 11 : i64} {
  func.func @mlp_block_kernel(%arg0: i32, %arg1: memref<16x32xf32, #tpu.memory_space<vmem>>, %arg2: memref<32x64xf32, #tpu.memory_space<vmem>>, %arg3: memref<1x64xf32, #tpu.memory_space<vmem>>, %arg4: memref<64x32xf32, #tpu.memory_space<vmem>>, %arg5: memref<1x32xf32, #tpu.memory_space<vmem>>, %arg6: memref<16x32xf32, #tpu.memory_space<vmem>>) attributes {dimension_semantics = [#tpu.dimension_semantics<parallel>], iteration_bounds = array<i64: 1>, scalar_prefetch = 0 : i64, scratch_operands = 0 : i64, tpu.core_type = #tpu.core_type<tc>, window_params = [{transform_indices = @transform_0, window_bounds = array<i64: 16, 32>}, {pipeline_mode = #tpu.pipeline_mode<synchronous>, transform_indices = @transform_1, window_bounds = array<i64: 32, 64>}, {pipeline_mode = #tpu.pipeline_mode<synchronous>, transform_indices = @transform_2, window_bounds = array<i64: 1, 64>}, {pipeline_mode = #tpu.pipeline_mode<synchronous>, transform_indices = @transform_3, window_bounds = array<i64: 64, 32>}, {pipeline_mode = #tpu.pipeline_mode<synchronous>, transform_indices = @transform_4, window_bounds = array<i64: 1, 32>}, {transform_indices = @transform_5, window_bounds = array<i64: 16, 32>}]} {
    %c0 = arith.constant 0 : index
    %c0_0 = arith.constant 0 : index
    %0 = vector.load %arg1[%c0, %c0_0] : memref<16x32xf32, #tpu.memory_space<vmem>>, vector<16x32xf32>
    %c0_1 = arith.constant 0 : index
    %c0_2 = arith.constant 0 : index
    %1 = vector.load %arg3[%c0_1, %c0_2] : memref<1x64xf32, #tpu.memory_space<vmem>>, vector<1x64xf32>
    %c0_3 = arith.constant 0 : index
    %c0_4 = arith.constant 0 : index
    %2 = vector.load %arg5[%c0_3, %c0_4] : memref<1x32xf32, #tpu.memory_space<vmem>>, vector<1x32xf32>
    %c0_5 = arith.constant 0 : index
    %c0_6 = arith.constant 0 : index
    %3 = vector.load %arg2[%c0_5, %c0_6] : memref<32x64xf32, #tpu.memory_space<vmem>>, vector<32x64xf32>
    %cst = arith.constant dense<0.000000e+00> : vector<16x64xf32>
    %4 = tpu.matmul %0, %3, %cst {dimension_numbers = #tpu.dot_dimension_numbers<[1], [0], [0], [1], [0, 0, 1, 1], [], []>} : vector<16x32xf32>, vector<32x64xf32>, vector<16x64xf32> -> vector<16x64xf32>
    %5 = vector.broadcast %1 : vector<1x64xf32> to vector<16x64xf32>
    %6 = arith.addf %4, %5 : vector<16x64xf32>
    %cst_7 = arith.constant 5.000000e-01 : f32
    %7 = vector.broadcast %cst_7 : f32 to vector<16x64xf32>
    %8 = arith.mulf %7, %6 : vector<16x64xf32>
    %cst_8 = arith.constant 0.707106769 : f32
    %9 = vector.broadcast %cst_8 : f32 to vector<16x64xf32>
    %10 = arith.mulf %6, %9 : vector<16x64xf32>
    %11 = math.erf %10 : vector<16x64xf32>
    %cst_9 = arith.constant 1.000000e+00 : f32
    %12 = vector.broadcast %cst_9 : f32 to vector<16x64xf32>
    %13 = arith.addf %12, %11 : vector<16x64xf32>
    %14 = arith.mulf %8, %13 : vector<16x64xf32>
    %c0_10 = arith.constant 0 : index
    %c0_11 = arith.constant 0 : index
    %15 = vector.load %arg4[%c0_10, %c0_11] : memref<64x32xf32, #tpu.memory_space<vmem>>, vector<64x32xf32>
    %cst_12 = arith.constant dense<0.000000e+00> : vector<16x32xf32>
    %16 = tpu.matmul %14, %15, %cst_12 {dimension_numbers = #tpu.dot_dimension_numbers<[1], [0], [0], [1], [0, 0, 1, 1], [], []>} : vector<16x64xf32>, vector<64x32xf32>, vector<16x32xf32> -> vector<16x32xf32>
    %17 = vector.broadcast %2 : vector<1x32xf32> to vector<16x32xf32>
    %18 = arith.addf %16, %17 : vector<16x32xf32>
    %c0_13 = arith.constant 0 : index
    %c0_14 = arith.constant 0 : index
    %19 = vector.load %arg6[%c0_13, %c0_14] : memref<16x32xf32, #tpu.memory_space<vmem>>, vector<16x32xf32>
    tpu.vector_store %arg6[%c0_13, %c0_14], %18 {strides = array<i32>} : memref<16x32xf32, #tpu.memory_space<vmem>>, vector<16x32xf32>,
    return
  }
  func.func @transform_0(%arg0: i32) -> (i32, i32) {
    %c0_i32 = arith.constant 0 : i32
    %c0_i32_0 = arith.constant 0 : i32
    return %arg0, %c0_i32 : i32, i32
  }
  func.func @transform_1(%arg0: i32) -> (i32, i32) {
    %c0_i32 = arith.constant 0 : i32
    %c0_i32_0 = arith.constant 0 : i32
    %c0_i32_1 = arith.constant 0 : i32
    return %c0_i32, %c0_i32_0 : i32, i32
  }
  func.func @transform_2(%arg0: i32) -> (i32, i32) {
    %c0_i32 = arith.constant 0 : i32
    %c0_i32_0 = arith.constant 0 : i32
    %c0_i32_1 = arith.constant 0 : i32
    return %c0_i32, %c0_i32_0 : i32, i32
  }
  func.func @transform_3(%arg0: i32) -> (i32, i32) {
    %c0_i32 = arith.constant 0 : i32
    %c0_i32_0 = arith.constant 0 : i32
    %c0_i32_1 = arith.constant 0 : i32
    return %c0_i32, %c0_i32_0 : i32, i32
  }
  func.func @transform_4(%arg0: i32) -> (i32, i32) {
    %c0_i32 = arith.constant 0 : i32
    %c0_i32_0 = arith.constant 0 : i32
    %c0_i32_1 = arith.constant 0 : i32
    return %c0_i32, %c0_i32_0 : i32, i32
  }
  func.func @transform_5(%arg0: i32) -> (i32, i32) {
    %c0_i32 = arith.constant 0 : i32
    %c0_i32_0 = arith.constant 0 : i32
    return %arg0, %c0_i32 : i32, i32
  }
}

</mosaic_0001>

<llo_original>
// kernel: tpu_custom_call.1
$region0: #{tpu_custom_call.1}
  #allocation0 [shape = 'u32[]', space=smem, size = 0x4, offset = 0x4, fixed_abs, tag = 'smem constant byte address 0x4 - core index']
  #allocation1 [shape = 'u32[144,128]{1,0:T(1,128)}', space=vmem, size = 0x12000, scoped, tag = 'internal scratch']
  %s0 = inlined_call_operand.vmem [shape: f32[16,32], index: 0, kind: input, shape index: {}]
  %s1 = inlined_call_operand.vmem [shape: f32[32,64], index: 1, kind: input, shape index: {}]
  %s2 = inlined_call_operand.vmem [shape: f32[1,64], index: 2, kind: input, shape index: {}]
  %s3 = inlined_call_operand.vmem [shape: f32[64,32], index: 3, kind: input, shape index: {}]
  %s4 = inlined_call_operand.vmem [shape: f32[1,32], index: 4, kind: input, shape index: {}]
  %s5 = inlined_call_operand.hbm [shape: f32[16,32], index: 5, kind: output, shape index: {}]
  %s6 = sld [smem:[#allocation0]]
  $region30: #{tpu_custom_call.1} parent=0
    _
  %s8 = ssub.s32 1, %s6
  %s9 = scalar_select 0, %s8, %s6
  $region1: #{tpu_custom_call.1} parent=0
    #allocation2 [shape = 'u8[8192]{0}', space=vmem, size = 0x2000, scoped, tag = 'output window, operand 0, single buffered']
    #allocation3 [shape = 's32[1]{0}', space=sflag, size = 0x4, scoped, tag = 'scoped memory for tpu_custom_call.1']
    %10 = vsyncpa [#allocation3], 0
    // Predicated region
    $region2: #{tpu_custom_call.1} parent=1 // pred_check
      _
    $region3: #{tpu_custom_call.1} parent=1 // pred_check_branch
      %12 = sbr.rel (0) target = $region5
    $region4: #{tpu_custom_call.1} parent=1 // pred_region
      _
    $region5: #{tpu_custom_call.1} parent=1 // pred_fallthru
      _
    // Predicated region
    $region6: #{tpu_custom_call.1} parent=1 // pred_check
      _
    $region7: #{tpu_custom_call.1} parent=1 // pred_check_branch
      %14 = sbr.rel (0) target = $region9
    $region8: #{tpu_custom_call.1} parent=1 // pred_region
      _
    $region9: #{tpu_custom_call.1} parent=1 // pred_fallthru
      _
    // Predicated region
    $region10: #{tpu_custom_call.1} parent=1 // pred_check
      _
    $region11: #{tpu_custom_call.1} parent=1 // pred_check_branch
      %16 = sbr.rel (0) target = $region13
    $region12: #{tpu_custom_call.1} parent=1 // pred_region
      _
    $region13: #{tpu_custom_call.1} parent=1 // pred_fallthru
      _
    // Predicated region
    $region14: #{tpu_custom_call.1} parent=1 // pred_check
      _
    $region15: #{tpu_custom_call.1} parent=1 // pred_check_branch
      %18 = sbr.rel (0) target = $region17
    $region16: #{tpu_custom_call.1} parent=1 // pred_region
      _
    $region17: #{tpu_custom_call.1} parent=1 // pred_fallthru
      _
    // Predicated region
    $region18: #{tpu_custom_call.1} parent=1 // pred_check
      _
    $region19: #{tpu_custom_call.1} parent=1 // pred_check_branch
      %20 = sbr.rel (0) target = $region21
    $region20: #{tpu_custom_call.1} parent=1 // pred_region
      _
    $region21: #{tpu_custom_call.1} parent=1 // pred_fallthru
      _
    %v21 = vld [vmem:[%s0] sm:$0xff]
    %v22 = vld [vmem:[%s0 + $0x8] sm:$0xff]
    %v23 = vld [vmem:[%s2] sm:$0x1]
    %v24 = vld [vmem:[%s4] sm:$0x1]
    %v25 = vld [vmem:[%s1] sm:$0xff]
    %v26 = vld [vmem:[%s1 + $0x8] sm:$0xff]
    %v27 = vld [vmem:[%s1 + $0x10] sm:$0xff]
    %v28 = vld [vmem:[%s1 + $0x18] sm:$0xff]
    %v30 = vlaneseq
    %v31 = vshrl.u32 %v30, 7
    %v32 = vsub.s32 0, %v31
    %v33 = vrot.slane %v23, %v32
    %vm35 = vcmask 261120
    %v37 = vsel %vm35, %v21, 0
    %v40 = vsel %vm35, %v22, 0
    %42 = vmatprep.subr.mxu0 0.0
    %43 = vmatpush1.msra.mxu0 %v25
    %44 = vmatprep.subr.mxu0 0.0
    %45 = vmatpush1.msra.mxu0 %v26
    %46 = vmatprep.subr.mxu0 0.0
    %47 = vmatpush1.msra.mxu0 %v27
    %48 = vmatprep.subr.mxu0 0.0
    %49 = vmatpush1.msra.mxu0 %v28
    %50 = vmatprep.subr.mxu0 0.0
    %51 = vmatpush1.msra.mxu0 0.0
    %52 = vmatprep.subr.mxu0 0.0
    %53 = vmatpush1.msra.mxu0 0.0
    %54 = vmatprep.subr.mxu0 0.0
    %55 = vmatpush1.msra.mxu0 0.0
    %56 = vmatprep.subr.mxu0 0.0
    %57 = vmatpush1.msra.mxu0 0.0
    %58 = vmatprep.subr.mxu0 0.0
    %59 = vmatpush1.msra.mxu0 0.0
    %60 = vmatprep.subr.mxu0 0.0
    %61 = vmatpush1.msra.mxu0 0.0
    %62 = vmatprep.subr.mxu0 0.0
    %63 = vmatpush1.msra.mxu0 0.0
    %64 = vmatprep.subr.mxu0 0.0
    %65 = vmatpush1.msra.mxu0 0.0
    %66 = vmatprep.subr.mxu0 0.0
    %67 = vmatpush1.msra.mxu0 0.0
    %68 = vmatprep.subr.mxu0 0.0
    %69 = vmatpush1.msra.mxu0 0.0
    %70 = vmatprep.subr.mxu0 0.0
    %71 = vmatpush1.msra.mxu0 0.0
    %72 = vmatprep.subr.mxu0 0.0
    %73 = vmatpush1.msra.mxu0 0.0
    %74 = vmatprep.subr.mxu0 0.0
    %75 = vmatpush1.msra.mxu0 0.0
    %76 = vmatprep.subr.mxu0 0.0
    %77 = vmatpush1.msra.mxu0 0.0
    %78 = vmatprep.subr.mxu0 0.0
    %79 = vmatpush1.msra.mxu0 0.0
    %80 = vmatprep.subr.mxu0 0.0
    %81 = vmatpush1.msra.mxu0 0.0
    %82 = vmatprep.subr.mxu0 0.0
    %83 = vmatpush1.msra.mxu0 0.0
    %84 = vmatprep.subr.mxu0 0.0
    %85 = vmatpush1.msra.mxu0 0.0
    %86 = vmatprep.subr.mxu0 0.0
    %87 = vmatpush1.msra.mxu0 0.0
    %88 = vmatprep.subr.mxu0 0.0
    %89 = vmatpush1.msra.mxu0 0.0
    %90 = vmatprep.subr.mxu0 0.0
    %91 = vmatpush1.msra.mxu0 0.0
    %92 = vmatprep.subr.mxu0 0.0
    %93 = vmatpush1.msra.mxu0 0.0
    %94 = vmatprep.subr.mxu0 0.0
    %95 = vmatpush1.msra.mxu0 0.0
    %96 = vmatprep.subr.mxu0 0.0
    %97 = vmatpush1.msra.mxu0 0.0
    %98 = vmatprep.subr.mxu0 0.0
    %99 = vmatpush1.msra.mxu0 0.0
    %100 = vmatprep.subr.mxu0 0.0
    %101 = vmatpush1.msra.mxu0 0.0
    %102 = vmatprep.subr.mxu0 0.0
    %103 = vmatpush1.msra.mxu0 0.0
    %104 = vmatprep.subr.mxu0 0.0
    %105 = vmatpush1.msra.mxu0 0.0
    %106 = vmatprep.mubr.f32.mxu0 0.0
    %107 = vmatmul.mubr.f32.gmra.mrb[0].mxu0 %v37
    %v108 = vpop.f32.mrb[0].mxu0
    %v109 = vadd.f32 %v33, %v108
    %v110 = vpop.f32.mrb[0].mxu0
    %111 = vmatprep.mubr.f32.mxu0 0.0
    %112 = vmatmul.mubr.f32.gmra.mrb[0].mxu0 %v40
    %v113 = vpop.f32.mrb[0].mxu0
    %v114 = vadd.f32 %v33, %v113
    %v115 = vpop.f32.mrb[0].mxu0
    %116 = vdwg.mxu0
    %v117 = vmul.f32 %v109, 0.5
    %v118 = vmul.f32 %v114, 0.5
    %v119 = vmul.f32 %v109, 0.70710677
    %v120 = vmul.f32 %v114, 0.70710677
    %v121 = verf.f32.pop %v119
    %v122 = verf.f32.pop %v120
    %v123 = vadd.f32 %v121, 1.0
    %v124 = vadd.f32 %v122, 1.0
    %v125 = vmul.f32 %v117, %v123
    %v126 = vmul.f32 %v118, %v124
    %v127 = vld [vmem:[%s3] sm:$0xff]
    %v128 = vld [vmem:[%s3 + $0x8] sm:$0xff]
    %v129 = vld [vmem:[%s3 + $0x10] sm:$0xff]
    %v130 = vld [vmem:[%s3 + $0x18] sm:$0xff]
    %v131 = vld [vmem:[%s3 + $0x20] sm:$0xff]
    %v132 = vld [vmem:[%s3 + $0x28] sm:$0xff]
    %v133 = vld [vmem:[%s3 + $0x30] sm:$0xff]
    %v134 = vld [vmem:[%s3 + $0x38] sm:$0xff]
    %v136 = vlaneseq
    %v137 = vshrl.u32 %v136, 7
    %v138 = vsub.s32 0, %v137
    %v139 = vrot.slane %v24, %v138
    %vm141 = vcmask 523264
    %v143 = vsel %vm141, %v125, 0
    %v146 = vsel %vm141, %v126, 0
    %148 = vmatprep.subr.mxu0 0.0
    %149 = vmatpush1.msra.mxu0 %v127
    %150 = vmatprep.subr.mxu0 0.0
    %151 = vmatpush1.msra.mxu0 %v128
    %152 = vmatprep.subr.mxu0 0.0
    %153 = vmatpush1.msra.mxu0 %v129
    %154 = vmatprep.subr.mxu0 0.0
    %155 = vmatpush1.msra.mxu0 %v130
    %156 = vmatprep.subr.mxu0 0.0
    %157 = vmatpush1.msra.mxu0 %v131
    %158 = vmatprep.subr.mxu0 0.0
    %159 = vmatpush1.msra.mxu0 %v132
    %160 = vmatprep.subr.mxu0 0.0
    %161 = vmatpush1.msra.mxu0 %v133
    %162 = vmatprep.subr.mxu0 0.0
    %163 = vmatpush1.msra.mxu0 %v134
    %164 = vmatprep.subr.mxu0 0.0
    %165 = vmatpush1.msra.mxu0 0.0
    %166 = vmatprep.subr.mxu0 0.0
    %167 = vmatpush1.msra.mxu0 0.0
    %168 = vmatprep.subr.mxu0 0.0
    %169 = vmatpush1.msra.mxu0 0.0
    %170 = vmatprep.subr.mxu0 0.0
    %171 = vmatpush1.msra.mxu0 0.0
    %172 = vmatprep.subr.mxu0 0.0
    %173 = vmatpush1.msra.mxu0 0.0
    %174 = vmatprep.subr.mxu0 0.0
    %175 = vmatpush1.msra.mxu0 0.0
    %176 = vmatprep.subr.mxu0 0.0
    %177 = vmatpush1.msra.mxu0 0.0
    %178 = vmatprep.subr.mxu0 0.0
    %179 = vmatpush1.msra.mxu0 0.0
    %180 = vmatprep.subr.mxu0 0.0
    %181 = vmatpush1.msra.mxu0 0.0
    %182 = vmatprep.subr.mxu0 0.0
    %183 = vmatpush1.msra.mxu0 0.0
    %184 = vmatprep.subr.mxu0 0.0
    %185 = vmatpush1.msra.mxu0 0.0
    %186 = vmatprep.subr.mxu0 0.0
    %187 = vmatpush1.msra.mxu0 0.0
    %188 = vmatprep.subr.mxu0 0.0
    %189 = vmatpush1.msra.mxu0 0.0
    %190 = vmatprep.subr.mxu0 0.0
    %191 = vmatpush1.msra.mxu0 0.0
    %192 = vmatprep.subr.mxu0 0.0
    %193 = vmatpush1.msra.mxu0 0.0
    %194 = vmatprep.subr.mxu0 0.0
    %195 = vmatpush1.msra.mxu0 0.0
    %196 = vmatprep.subr.mxu0 0.0
    %197 = vmatpush1.msra.mxu0 0.0
    %198 = vmatprep.subr.mxu0 0.0
    %199 = vmatpush1.msra.mxu0 0.0
    %200 = vmatprep.subr.mxu0 0.0
    %201 = vmatpush1.msra.mxu0 0.0
    %202 = vmatprep.subr.mxu0 0.0
    %203 = vmatpush1.msra.mxu0 0.0
    %204 = vmatprep.subr.mxu0 0.0
    %205 = vmatpush1.msra.mxu0 0.0
    %206 = vmatprep.subr.mxu0 0.0
    %207 = vmatpush1.msra.mxu0 0.0
    %208 = vmatprep.subr.mxu0 0.0
    %209 = vmatpush1.msra.mxu0 0.0
    %210 = vmatprep.subr.mxu0 0.0
    %211 = vmatpush1.msra.mxu0 0.0
    %212 = vmatprep.mubr.f32.mxu0 0.0
    %213 = vmatmul.mubr.f32.gmra.mrb[0].mxu0 %v143
    %v214 = vpop.f32.mrb[0].mxu0
    %v215 = vadd.f32 %v139, %v214
    %v216 = vpop.f32.mrb[0].mxu0
    %217 = vmatprep.mubr.f32.mxu0 0.0
    %218 = vmatmul.mubr.f32.gmra.mrb[0].mxu0 %v146
    %v219 = vpop.f32.mrb[0].mxu0
    %v220 = vadd.f32 %v139, %v219
    %v221 = vpop.f32.mrb[0].mxu0
    %222 = vdwg.mxu0
    %223 = vst.msk [vmem:[#allocation2] sm:$0xff] %vm35, %v215
    %224 = vst.msk [vmem:[#allocation2 + $0x8] sm:$0xff] %vm35, %v220
    // Predicated region
    $region22: #{tpu_custom_call.1} parent=1 // pred_check
      _
    $region23: #{tpu_custom_call.1} parent=1 // pred_check_branch
      %226 = sbr.rel (0) target = $region25
    $region24: #{tpu_custom_call.1} parent=1 // pred_region
      %s228 = ssub.s32 256, 256
      %229 = vsyncadd [#allocation3], %s228
      %s230 = sshll.u32 [#allocation2], 4
      %s231 = int_to_ptr.vmem [resolvable:$true] %s230
      %236 = dma.vmem_to_hbm [thread:$0]  %s231, 256, %s5, [#allocation3], 128, 128, 8
    $region25: #{tpu_custom_call.1} parent=1 // pred_fallthru
      _
    // Predicated region
    $region26: #{tpu_custom_call.1} parent=1 // pred_check
      _
    $region27: #{tpu_custom_call.1} parent=1 // pred_check_branch
      %238 = sbr.rel (0) target = $region29
    $region28: #{tpu_custom_call.1} parent=1 // pred_region
      %239 = dma.done [#allocation3], 256
    $region29: #{tpu_custom_call.1} parent=1 // pred_fallthru
      _
    %240 = vsyncpa [#allocation3], 1

// kernel: tpu_custom_call.1
$region0: #{tpu_custom_call.1}
  #allocation0 [shape = 'u32[]', space=smem, size = 0x4, offset = 0x4, fixed_abs, tag = 'smem constant byte address 0x4 - core index']
  #allocation1 [shape = 'u32[144,128]{1,0:T(1,128)}', space=vmem, size = 0x12000, scoped, tag = 'internal scratch']
  %s0 = inlined_call_operand.vmem [shape: f32[16,32], index: 0, kind: input, shape index: {}]
  %s1 = inlined_call_operand.vmem [shape: f32[32,64], index: 1, kind: input, shape index: {}]
  %s2 = inlined_call_operand.vmem [shape: f32[1,64], index: 2, kind: input, shape index: {}]
  %s3 = inlined_call_operand.vmem [shape: f32[64,32], index: 3, kind: input, shape index: {}]
  %s4 = inlined_call_operand.vmem [shape: f32[1,32], index: 4, kind: input, shape index: {}]
  %s5 = inlined_call_operand.hbm [shape: f32[16,32], index: 5, kind: output, shape index: {}]
  %s6 = sld [smem:[#allocation0]]
  $region30: #{tpu_custom_call.1} parent=0
    _
  %s8 = ssub.s32 1, %s6
  %s9 = scalar_select 0, %s8, %s6
  $region1: #{tpu_custom_call.1} parent=0
    #allocation2 [shape = 'u8[8192]{0}', space=vmem, size = 0x2000, scoped, tag = 'output window, operand 0, single buffered']
    #allocation3 [shape = 's32[1]{0}', space=sflag, size = 0x4, scoped, tag = 'scoped memory for tpu_custom_call.1']
    %10 = vsyncpa [#allocation3], 0
    // Predicated region
    $region2: #{tpu_custom_call.1} parent=1 // pred_check
      _
    $region3: #{tpu_custom_call.1} parent=1 // pred_check_branch
      %12 = sbr.rel (0) target = $region5
    $region4: #{tpu_custom_call.1} parent=1 // pred_region
      _
    $region5: #{tpu_custom_call.1} parent=1 // pred_fallthru
      _
    // Predicated region
    $region6: #{tpu_custom_call.1} parent=1 // pred_check
      _
    $region7: #{tpu_custom_call.1} parent=1 // pred_check_branch
      %14 = sbr.rel (0) target = $region9
    $region8: #{tpu_custom_call.1} parent=1 // pred_region
      _
    $region9: #{tpu_custom_call.1} parent=1 // pred_fallthru
      _
    // Predicated region
    $region10: #{tpu_custom_call.1} parent=1 // pred_check
      _
    $region11: #{tpu_custom_call.1} parent=1 // pred_check_branch
      %16 = sbr.rel (0) target = $region13
    $region12: #{tpu_custom_call.1} parent=1 // pred_region
      _
    $region13: #{tpu_custom_call.1} parent=1 // pred_fallthru
      _
    // Predicated region
    $region14: #{tpu_custom_call.1} parent=1 // pred_check
      _
    $region15: #{tpu_custom_call.1} parent=1 // pred_check_branch
      %18 = sbr.rel (0) target = $region17
    $region16: #{tpu_custom_call.1} parent=1 // pred_region
      _
    $region17: #{tpu_custom_call.1} parent=1 // pred_fallthru
      _
    // Predicated region
    $region18: #{tpu_custom_call.1} parent=1 // pred_check
      _
    $region19: #{tpu_custom_call.1} parent=1 // pred_check_branch
      %20 = sbr.rel (0) target = $region21
    $region20: #{tpu_custom_call.1} parent=1 // pred_region
      _
    $region21: #{tpu_custom_call.1} parent=1 // pred_fallthru
      _
    %v21 = vld [vmem:[%s0] sm:$0xff]
    %v22 = vld [vmem:[%s0 + $0x8] sm:$0xff]
    %v23 = vld [vmem:[%s2] sm:$0x1]
    %v24 = vld [vmem:[%s4] sm:$0x1]
    %v25 = vld [vmem:[%s1] sm:$0xff]
    %v26 = vld [vmem:[%s1 + $0x8] sm:$0xff]
    %v27 = vld [vmem:[%s1 + $0x10] sm:$0xff]
    %v28 = vld [vmem:[%s1 + $0x18] sm:$0xff]
    %v30 = vlaneseq
    %v31 = vshrl.u32 %v30, 7
    %v32 = vsub.s32 0, %v31
    %v33 = vrot.slane %v23, %v32
    %vm35 = vcmask 261120
    %v37 = vsel %vm35, %v21, 0
    %v40 = vsel %vm35, %v22, 0
    %42 = vmatprep.subr.mxu0 0.0
    %43 = vmatpush1.msra.mxu0 %v25
    %44 = vmatprep.subr.mxu0 0.0
    %45 = vmatpush1.msra.mxu0 %v26
    %46 = vmatprep.subr.mxu0 0.0
    %47 = vmatpush1.msra.mxu0 %v27
    %48 = vmatprep.subr.mxu0 0.0
    %49 = vmatpush1.msra.mxu0 %v28
    %50 = vmatprep.subr.mxu0 0.0
    %51 = vmatpush1.msra.mxu0 0.0
    %52 = vmatprep.subr.mxu0 0.0
    %53 = vmatpush1.msra.mxu0 0.0
    %54 = vmatprep.subr.mxu0 0.0
    %55 = vmatpush1.msra.mxu0 0.0
    %56 = vmatprep.subr.mxu0 0.0
    %57 = vmatpush1.msra.mxu0 0.0
    %58 = vmatprep.subr.mxu0 0.0
    %59 = vmatpush1.msra.mxu0 0.0
    %60 = vmatprep.subr.mxu0 0.0
    %61 = vmatpush1.msra.mxu0 0.0
    %62 = vmatprep.subr.mxu0 0.0
    %63 = vmatpush1.msra.mxu0 0.0
    %64 = vmatprep.subr.mxu0 0.0
    %65 = vmatpush1.msra.mxu0 0.0
    %66 = vmatprep.subr.mxu0 0.0
    %67 = vmatpush1.msra.mxu0 0.0
    %68 = vmatprep.subr.mxu0 0.0
    %69 = vmatpush1.msra.mxu0 0.0
    %70 = vmatprep.subr.mxu0 0.0
    %71 = vmatpush1.msra.mxu0 0.0
    %72 = vmatprep.subr.mxu0 0.0
    %73 = vmatpush1.msra.mxu0 0.0
    %74 = vmatprep.subr.mxu0 0.0
    %75 = vmatpush1.msra.mxu0 0.0
    %76 = vmatprep.subr.mxu0 0.0
    %77 = vmatpush1.msra.mxu0 0.0
    %78 = vmatprep.subr.mxu0 0.0
    %79 = vmatpush1.msra.mxu0 0.0
    %80 = vmatprep.subr.mxu0 0.0
    %81 = vmatpush1.msra.mxu0 0.0
    %82 = vmatprep.subr.mxu0 0.0
    %83 = vmatpush1.msra.mxu0 0.0
    %84 = vmatprep.subr.mxu0 0.0
    %85 = vmatpush1.msra.mxu0 0.0
    %86 = vmatprep.subr.mxu0 0.0
    %87 = vmatpush1.msra.mxu0 0.0
    %88 = vmatprep.subr.mxu0 0.0
    %89 = vmatpush1.msra.mxu0 0.0
    %90 = vmatprep.subr.mxu0 0.0
    %91 = vmatpush1.msra.mxu0 0.0
    %92 = vmatprep.subr.mxu0 0.0
    %93 = vmatpush1.msra.mxu0 0.0
    %94 = vmatprep.subr.mxu0 0.0
    %95 = vmatpush1.msra.mxu0 0.0
    %96 = vmatprep.subr.mxu0 0.0
    %97 = vmatpush1.msra.mxu0 0.0
    %98 = vmatprep.subr.mxu0 0.0
    %99 = vmatpush1.msra.mxu0 0.0
    %100 = vmatprep.subr.mxu0 0.0
    %101 = vmatpush1.msra.mxu0 0.0
    %102 = vmatprep.subr.mxu0 0.0
    %103 = vmatpush1.msra.mxu0 0.0
    %104 = vmatprep.subr.mxu0 0.0
    %105 = vmatpush1.msra.mxu0 0.0
    %106 = vmatprep.mubr.f32.mxu0 0.0
    %107 = vmatmul.mubr.f32.gmra.mrb[0].mxu0 %v37
    %v108 = vpop.f32.mrb[0].mxu0
    %v109 = vadd.f32 %v33, %v108
    %v110 = vpop.f32.mrb[0].mxu0
    %111 = vmatprep.mubr.f32.mxu0 0.0
    %112 = vmatmul.mubr.f32.gmra.mrb[0].mxu0 %v40
    %v113 = vpop.f32.mrb[0].mxu0
    %v114 = vadd.f32 %v33, %v113
    %v115 = vpop.f32.mrb[0].mxu0
    %116 = vdwg.mxu0
    %v117 = vmul.f32 %v109, 0.5
    %v118 = vmul.f32 %v114, 0.5
    %v119 = vmul.f32 %v109, 0.70710677
    %v120 = vmul.f32 %v114, 0.70710677
    %v121 = verf.f32.pop %v119
    %v122 = verf.f32.pop %v120
    %v123 = vadd.f32 %v121, 1.0
    %v124 = vadd.f32 %v122, 1.0
    %v125 = vmul.f32 %v117, %v123
    %v126 = vmul.f32 %v118, %v124
    %v127 = vld [vmem:[%s3] sm:$0xff]
    %v128 = vld [vmem:[%s3 + $0x8] sm:$0xff]
    %v129 = vld [vmem:[%s3 + $0x10] sm:$0xff]
    %v130 = vld [vmem:[%s3 + $0x18] sm:$0xff]
    %v131 = vld [vmem:[%s3 + $0x20] sm:$0xff]
    %v132 = vld [vmem:[%s3 + $0x28] sm:$0xff]
    %v133 = vld [vmem:[%s3 + $0x30] sm:$0xff]
    %v134 = vld [vmem:[%s3 + $0x38] sm:$0xff]
    %v136 = vlaneseq
    %v137 = vshrl.u32 %v136, 7
    %v138 = vsub.s32 0, %v137
    %v139 = vrot.slane %v24, %v138
    %vm141 = vcmask 523264
    %v143 = vsel %vm141, %v125, 0
    %v146 = vsel %vm141, %v126, 0
    %148 = vmatprep.subr.mxu0 0.0
    %149 = vmatpush1.msra.mxu0 %v127
    %150 = vmatprep.subr.mxu0 0.0
    %151 = vmatpush1.msra.mxu0 %v128
    %152 = vmatprep.subr.mxu0 0.0
    %153 = vmatpush1.msra.mxu0 %v129
    %154 = vmatprep.subr.mxu0 0.0
    %155 = vmatpush1.msra.mxu0 %v130
    %156 = vmatprep.subr.mxu0 0.0
    %157 = vmatpush1.msra.mxu0 %v131
    %158 = vmatprep.subr.mxu0 0.0
    %159 = vmatpush1.msra.mxu0 %v132
    %160 = vmatprep.subr.mxu0 0.0
    %161 = vmatpush1.msra.mxu0 %v133
    %162 = vmatprep.subr.mxu0 0.0
    %163 = vmatpush1.msra.mxu0 %v134
    %164 = vmatprep.subr.mxu0 0.0
    %165 = vmatpush1.msra.mxu0 0.0
    %166 = vmatprep.subr.mxu0 0.0
    %167 = vmatpush1.msra.mxu0 0.0
    %168 = vmatprep.subr.mxu0 0.0
    %169 = vmatpush1.msra.mxu0 0.0
    %170 = vmatprep.subr.mxu0 0.0
    %171 = vmatpush1.msra.mxu0 0.0
    %172 = vmatprep.subr.mxu0 0.0
    %173 = vmatpush1.msra.mxu0 0.0
    %174 = vmatprep.subr.mxu0 0.0
    %175 = vmatpush1.msra.mxu0 0.0
    %176 = vmatprep.subr.mxu0 0.0
    %177 = vmatpush1.msra.mxu0 0.0
    %178 = vmatprep.subr.mxu0 0.0
    %179 = vmatpush1.msra.mxu0 0.0
    %180 = vmatprep.subr.mxu0 0.0
    %181 = vmatpush1.msra.mxu0 0.0
    %182 = vmatprep.subr.mxu0 0.0
    %183 = vmatpush1.msra.mxu0 0.0
    %184 = vmatprep.subr.mxu0 0.0
    %185 = vmatpush1.msra.mxu0 0.0
    %186 = vmatprep.subr.mxu0 0.0
    %187 = vmatpush1.msra.mxu0 0.0
    %188 = vmatprep.subr.mxu0 0.0
    %189 = vmatpush1.msra.mxu0 0.0
    %190 = vmatprep.subr.mxu0 0.0
    %191 = vmatpush1.msra.mxu0 0.0
    %192 = vmatprep.subr.mxu0 0.0
    %193 = vmatpush1.msra.mxu0 0.0
    %194 = vmatprep.subr.mxu0 0.0
    %195 = vmatpush1.msra.mxu0 0.0
    %196 = vmatprep.subr.mxu0 0.0
    %197 = vmatpush1.msra.mxu0 0.0
    %198 = vmatprep.subr.mxu0 0.0
    %199 = vmatpush1.msra.mxu0 0.0
    %200 = vmatprep.subr.mxu0 0.0
    %201 = vmatpush1.msra.mxu0 0.0
    %202 = vmatprep.subr.mxu0 0.0
    %203 = vmatpush1.msra.mxu0 0.0
    %204 = vmatprep.subr.mxu0 0.0
    %205 = vmatpush1.msra.mxu0 0.0
    %206 = vmatprep.subr.mxu0 0.0
    %207 = vmatpush1.msra.mxu0 0.0
    %208 = vmatprep.subr.mxu0 0.0
    %209 = vmatpush1.msra.mxu0 0.0
    %210 = vmatprep.subr.mxu0 0.0
    %211 = vmatpush1.msra.mxu0 0.0
    %212 = vmatprep.mubr.f32.mxu0 0.0
    %213 = vmatmul.mubr.f32.gmra.mrb[0].mxu0 %v143
    %v214 = vpop.f32.mrb[0].mxu0
    %v215 = vadd.f32 %v139, %v214
    %v216 = vpop.f32.mrb[0].mxu0
    %217 = vmatprep.mubr.f32.mxu0 0.0
    %218 = vmatmul.mubr.f32.gmra.mrb[0].mxu0 %v146
    %v219 = vpop.f32.mrb[0].mxu0
    %v220 = vadd.f32 %v139, %v219
    %v221 = vpop.f32.mrb[0].mxu0
    %222 = vdwg.mxu0
    %223 = vst.msk [vmem:[#allocation2] sm:$0xff] %vm35, %v215
    %224 = vst.msk [vmem:[#allocation2 + $0x8] sm:$0xff] %vm35, %v220
    // Predicated region
    $region22: #{tpu_custom_call.1} parent=1 // pred_check
      _
    $region23: #{tpu_custom_call.1} parent=1 // pred_check_branch
      %226 = sbr.rel (0) target = $region25
    $region24: #{tpu_custom_call.1} parent=1 // pred_region
      %s228 = ssub.s32 256, 256
      %229 = vsyncadd [#allocation3], %s228
      %s230 = sshll.u32 [#allocation2], 4
      %s231 = int_to_ptr.vmem [resolvable:$true] %s230
      %236 = dma.vmem_to_hbm [thread:$0]  %s231, 256, %s5, [#allocation3], 128, 128, 8
    $region25: #{tpu_custom_call.1} parent=1 // pred_fallthru
      _
    // Predicated region
    $region26: #{tpu_custom_call.1} parent=1 // pred_check
      _
    $region27: #{tpu_custom_call.1} parent=1 // pred_check_branch
      %238 = sbr.rel (0) target = $region29
    $region28: #{tpu_custom_call.1} parent=1 // pred_region
      %239 = dma.done [#allocation3], 256
    $region29: #{tpu_custom_call.1} parent=1 // pred_fallthru
      _
    %240 = vsyncpa [#allocation3], 1

</llo_original>
